<compile_context>
chip_gen: v5e
topology: v5e:2x2
jax: 0.10.0
libtpu: 0.0.40
codegen_flags: <defaults>
</compile_context>

<pallas_src>
import jax
import jax.numpy as jnp
from jax.experimental import pallas as pl
from jax.experimental.pallas import tpu as pltpu


# ---------------------------------------------------------------------------
# Kernels
# ---------------------------------------------------------------------------

def _rope_kernel(cos_ref, sin_ref, x_ref, o_ref):
    """out = x * [cos, cos] + roll(x, D/2) * [-sin, +sin]
           = [x1*cos - x2*sin, x1*sin + x2*cos].

    cos_ref/sin_ref: (block_p, 1, D) precomputed f32 tables (sin pre-signed).
    x_ref/o_ref:     (block_p, block_s, D) tiles.
    Only VALU muls/adds + one XLU roll per step; no EUP / iota / select work.
    """
    D = x_ref.shape[-1]
    x = x_ref[...].astype(jnp.float32)
    xr = pltpu.roll(x, shift=D // 2, axis=2)          # half-swap on the XLU slot
    o_ref[...] = (x * cos_ref[...] + xr * sin_ref[...]).astype(o_ref.dtype)


def _rope_kernel_folded(cos_ref, sin_hi_ref, sin_lo_ref, x_ref, o_ref):
    """Lane-folded variant for D % 128 != 0: two s-rows share one lane row.

    A folded row (width W = 2*D) is [a1, a2, b1, b2] (segments of h = D/2,
    a = s-row 2k, b = s-row 2k+1).  Assuming pltpu.roll matches jnp.roll
    (element i moves to index i + shift):
      roll(+h)  -> [b2, a1, a2, b1]   (pairs with sin_hi = [0, +s, 0, +s])
      roll(-h)  -> [a2, b1, b2, a1]   (pairs with sin_lo = [-s, 0, -s, 0])
    so out = x*[c,c,c,c] + roll(+h)*sin_hi + roll(-h)*sin_lo reproduces
    [a1*c - a2*s, a2*c + a1*s, b1*c - b2*s, b2*c + b1*s] per folded row.
    """
    W = x_ref.shape[-1]            # folded width = 2 * D
    h = W // 4                     # original D // 2
    x = x_ref[...].astype(jnp.float32)
    x_hi = pltpu.roll(x, shift=h, axis=2)        # element i -> i + h
    x_lo = pltpu.roll(x, shift=W - h, axis=2)    # element i -> i - h
    o_ref[...] = (x * cos_ref[...] + x_hi * sin_hi_ref[...]
                  + x_lo * sin_lo_ref[...]).astype(o_ref.dtype)


# ---------------------------------------------------------------------------
# Tiling helpers
# ---------------------------------------------------------------------------

def _largest_aligned_divisor(n, align, limit):
    """Largest d with d % align == 0, d | n, d <= limit; 0 if none."""
    best = 0
    d = align
    limit = min(n, limit)
    while d <= limit:
        if n % d == 0:
            best = d
        d += align
    return best


def _largest_divisor_leq(n, limit):
    """Largest d with d | n and d <= limit; 0 if limit < 1."""
    for d in range(min(n, int(limit)), 0, -1):
        if n % d == 0:
            return d
    return 0


def _choose_tiles(P, S, D, itemsize, target_bytes):
    """Pick (block_p, block_s) dividing (P, S), lane/sublane-legal, ~target_bytes.

    Prefers block_s = S (one long contiguous HBM slab per leading-axis block)
    and splits the leading axis first when forcing >= 2 grid steps, so each
    v7x TensorCore streams a contiguous DMA.
    """
    s_align = 8 if itemsize >= 4 else (16 if itemsize == 2 else 32)
    row_bytes = D * itemsize

    if S % s_align != 0 or S * row_bytes <= target_bytes:
        block_s = S                                   # full extent is always legal
    else:
        limit = max(s_align, target_bytes // row_bytes)
        block_s = _largest_aligned_divisor(S, s_align, limit) or S

    bp_cap = max(1, target_bytes // max(1, block_s * row_bytes))
    block_p = _largest_divisor_leq(P, bp_cap) or 1

    # Best-effort >= 2 grid steps (v7x has 2 TensorCores).  Split P first.
    if (P // block_p) * (S // block_s) < 2:
        d = _largest_divisor_leq(P, P // 2)
        if d:
            block_p = d
        elif S % (2 * s_align) == 0:
            block_s //= 2
    return block_p, block_s


# ---------------------------------------------------------------------------
# Wrapper
# ---------------------------------------------------------------------------

def rotary_embedding(x, inv_freq, *, target_tile_bytes=4 * 1024 * 1024, donate_x=False):
    """Pallas equivalent of RotaryEmbedding.forward(x).

    target_tile_bytes: sweepable; ~4 MiB is a safe default for v5e/v6e/v7x
    (v6e tolerates 6-8 MiB; v7x should stay <= ~4 MiB given 64 MiB VMEM).
    """
    P, S, D = x.shape
    qh = inv_freq.shape[-1]                          # == dim // 2
    assert D == 4 * qh, "x last dim must be 2*dim (PyTorch chunk requirement)"
    # PyTorch broadcast constraint: the (S,1,dim) cos table pairs with the
    # LEADING axis of x.
    assert P == S, "module's broadcasting requires x.shape[0] == x.shape[-2]"

    itemsize = jnp.dtype(x.dtype).itemsize
    half = D // 2

    # --- Precompute rotary tables once (wrapper / XLA side). -----------------
    # pos as f32: exact up to 2^24, same limitation as the f32 PyTorch path.
    pos = jnp.arange(P, dtype=jnp.float32)
    inv4 = jnp.tile(inv_freq.astype(jnp.float32).reshape(-1), 4)        # (D,)
    ang = pos[:, None] * inv4[None, :]                                  # (P, D)
    cos_tab = jnp.cos(ang)                                              # [c, c]
    sign = jnp.where(jnp.arange(D) >= half, 1.0, -1.0).astype(jnp.float32)
    sin_tab = jnp.sin(ang) * sign                                       # [-s, +s]

    # --- Lane-density guard: fold pairs of s-rows if D is not lane-dense. ----
    fold = (D % 128 != 0) and (S % 2 == 0)
    if not fold:
        kernel = _rope_kernel
        x_in = x
        W, S_eff = D, S
        tables = (cos_tab[:, None, :], sin_tab[:, None, :])             # (P,1,D)
        n_rolls = 1
    else:
        kernel = _rope_kernel_folded
        W, S_eff = 2 * D, S // 2
        x_in = x.reshape(P, S_eff, W)                                   # free reshape
        lane = jnp.arange(D)
        sin_hi = jnp.tile(jnp.where(lane >= half, sin_tab, 0.0), (1, 2))  # [0,+s,0,+s]
        sin_lo = jnp.tile(jnp.where(lane < half, sin_tab, 0.0), (1, 2))   # [-s,0,-s,0]
        cos_f = jnp.tile(cos_tab, (1, 2))                                 # [c,c,c,c]
        tables = (cos_f[:, None, :], sin_hi[:, None, :], sin_lo[:, None, :])
        n_rolls = 2

    block_p, block_s = _choose_tiles(P, S_eff, W, itemsize, target_tile_bytes)
    grid = (P // block_p, S_eff // block_s)

    tab_spec = pl.BlockSpec((block_p, 1, W), lambda i, j: (i, 0, 0))
    # NOTE: if profiling shows exposed DMA at this tile size, sweep
    # pipeline_mode=pl.Buffered(3) on this spec before shrinking tiles.
    x_spec = pl.BlockSpec((block_p, block_s, W), lambda i, j: (i, j, 0))

    # --- Temp-aware VMEM budget (capped below v7x's 64 MiB). -----------------
    tile_bytes = block_p * block_s * W * itemsize          # x / out tile
    f32_tile = block_p * block_s * W * 4                   # cast + roll temporaries
    tab_bytes = len(tables) * 2 * block_p * W * 4          # double-buffered tables
    vmem_needed = 4 * tile_bytes + (2 + n_rolls) * f32_tile + tab_bytes + (2 << 20)
    vmem_limit = int(min(max(vmem_needed, 16 << 20), 56 << 20))

    out = pl.pallas_call(
        kernel,
        out_shape=jax.ShapeDtypeStruct((P, S_eff, W), x.dtype),
        grid_spec=pltpu.PrefetchScalarGridSpec(
            num_scalar_prefetch=0,
            grid=grid,
            in_specs=[tab_spec] * len(tables) + [x_spec],
            out_specs=x_spec,
        ),
        compiler_params=pltpu.CompilerParams(
            # "parallel" is portable; on v7x, pltpu.CORE_PARALLEL on the
            # leading axis is a worthwhile sweep for the 2-TC split.
            dimension_semantics=("parallel", "parallel"),
            vmem_limit_bytes=vmem_limit,
        ),
        input_output_aliases=({len(tables): 0} if donate_x else {}),
    )(*tables, x_in)

    if fold:
        out = out.reshape(P, S, D)
    return out


# ---------------------------------------------------------------------------
# Pure-JAX reference (line-for-line transcription of the PyTorch forward)
# ---------------------------------------------------------------------------

def rotary_ref(x, inv_freq):
    seq_len = x.shape[-2]
    t = jnp.arange(seq_len, dtype=inv_freq.dtype)
    freqs = jnp.einsum("i,j->ij", t, inv_freq)
    emb = jnp.concatenate([freqs, freqs], axis=-1)
    cos = jnp.cos(emb)[:, None, :]
    sin = jnp.sin(emb)[:, None, :]
    x1, x2 = jnp.split(x, 2, axis=-1)
    rx1 = x1 * cos - x2 * sin
    rx2 = x1 * sin + x2 * cos
    return jnp.concatenate([rx1, rx2], axis=-1)


if __name__ == "__main__":
    # Module "parameter" (registered buffer), initialized exactly as in __init__.
    dim = 64                                   # RotaryEmbedding(dim)
    inv_freq = 1.0 / (10000.0 ** (jnp.arange(0, dim, 2, dtype=jnp.float32) / dim))

    # Small input consistent with the module's broadcasting: (P=S, S, 2*dim).
    S = 16
    x = jax.random.normal(jax.random.PRNGKey(0), (S, S, 2 * dim), dtype=jnp.float32)

    ref = rotary_ref(x, inv_freq)

    out = rotary_embedding(x, inv_freq)
    out = jax.block_until_ready(out)

    assert out.shape == ref.shape and out.dtype == ref.dtype
    assert jnp.allclose(out, ref, rtol=1e-5, atol=1e-5), "mismatch vs reference"

    print("KERNEL_OK")
</pallas_src>

<mosaic_0001>
module attributes {stable_mosaic.version = 11 : i64} {
  func.func @_rope_kernel(%arg0: i32, %arg1: i32, %arg2: memref<8x1x128xf32, #tpu.memory_space<vmem>>, %arg3: memref<8x1x128xf32, #tpu.memory_space<vmem>>, %arg4: memref<8x16x128xf32, #tpu.memory_space<vmem>>, %arg5: memref<8x16x128xf32, #tpu.memory_space<vmem>>) attributes {dimension_semantics = [#tpu.dimension_semantics<parallel>, #tpu.dimension_semantics<parallel>], iteration_bounds = array<i64: 2, 1>, scalar_prefetch = 0 : i64, scratch_operands = 0 : i64, tpu.core_type = #tpu.core_type<tc>, window_params = [{transform_indices = @transform_0, window_bounds = array<i64: 8, 1, 128>}, {transform_indices = @transform_1, window_bounds = array<i64: 8, 1, 128>}, {transform_indices = @transform_2, window_bounds = array<i64: 8, 16, 128>}, {transform_indices = @transform_3, window_bounds = array<i64: 8, 16, 128>}]} {
    %c0 = arith.constant 0 : index
    %c0_0 = arith.constant 0 : index
    %c0_1 = arith.constant 0 : index
    %0 = vector.load %arg4[%c0, %c0_0, %c0_1] : memref<8x16x128xf32, #tpu.memory_space<vmem>>, vector<8x16x128xf32>
    %c64_i32 = arith.constant 64 : i32
    %1 = tpu.dynamic_rotate %0 by %c64_i32 dim 2 : vector<8x16x128xf32>, i32 -> vector<8x16x128xf32>
    %c0_2 = arith.constant 0 : index
    %c0_3 = arith.constant 0 : index
    %c0_4 = arith.constant 0 : index
    %2 = vector.load %arg2[%c0_2, %c0_3, %c0_4] : memref<8x1x128xf32, #tpu.memory_space<vmem>>, vector<8x1x128xf32>
    %3 = vector.broadcast %2 : vector<8x1x128xf32> to vector<8x16x128xf32>
    %4 = arith.mulf %0, %3 : vector<8x16x128xf32>
    %c0_5 = arith.constant 0 : index
    %c0_6 = arith.constant 0 : index
    %c0_7 = arith.constant 0 : index
    %5 = vector.load %arg3[%c0_5, %c0_6, %c0_7] : memref<8x1x128xf32, #tpu.memory_space<vmem>>, vector<8x1x128xf32>
    %6 = vector.broadcast %5 : vector<8x1x128xf32> to vector<8x16x128xf32>
    %7 = arith.mulf %1, %6 : vector<8x16x128xf32>
    %8 = arith.addf %4, %7 : vector<8x16x128xf32>
    %c0_8 = arith.constant 0 : index
    %c0_9 = arith.constant 0 : index
    %c0_10 = arith.constant 0 : index
    %9 = vector.load %arg5[%c0_8, %c0_9, %c0_10] : memref<8x16x128xf32, #tpu.memory_space<vmem>>, vector<8x16x128xf32>
    tpu.vector_store %arg5[%c0_8, %c0_9, %c0_10], %8 {strides = array<i32>} : memref<8x16x128xf32, #tpu.memory_space<vmem>>, vector<8x16x128xf32>,
    return
  }
  func.func @transform_0(%arg0: i32, %arg1: i32) -> (i32, i32, i32) {
    %c0_i32 = arith.constant 0 : i32
    %c0_i32_0 = arith.constant 0 : i32
    %c0_i32_1 = arith.constant 0 : i32
    return %arg0, %c0_i32, %c0_i32_0 : i32, i32, i32
  }
  func.func @transform_1(%arg0: i32, %arg1: i32) -> (i32, i32, i32) {
    %c0_i32 = arith.constant 0 : i32
    %c0_i32_0 = arith.constant 0 : i32
    %c0_i32_1 = arith.constant 0 : i32
    return %arg0, %c0_i32, %c0_i32_0 : i32, i32, i32
  }
  func.func @transform_2(%arg0: i32, %arg1: i32) -> (i32, i32, i32) {
    %c0_i32 = arith.constant 0 : i32
    %c0_i32_0 = arith.constant 0 : i32
    return %arg0, %arg1, %c0_i32 : i32, i32, i32
  }
  func.func @transform_3(%arg0: i32, %arg1: i32) -> (i32, i32, i32) {
    %c0_i32 = arith.constant 0 : i32
    %c0_i32_0 = arith.constant 0 : i32
    return %arg0, %arg1, %c0_i32 : i32, i32, i32
  }
}

</mosaic_0001>

<llo_original>
// kernel: tpu_custom_call.1
$region0: #{tpu_custom_call.1}
  #allocation0 [shape = 'u32[]', space=smem, size = 0x4, offset = 0x4, fixed_abs, tag = 'smem constant byte address 0x4 - core index']
  #allocation1 [shape = 'u32[72,128]{1,0:T(1,128)}', space=vmem, size = 0x9000, scoped, tag = 'internal scratch']
  %s0 = inlined_call_operand.hbm [shape: f32[16,1,128], index: 0, kind: input, shape index: {}]
  %s1 = inlined_call_operand.hbm [shape: f32[16,1,128], index: 1, kind: input, shape index: {}]
  %s2 = inlined_call_operand.hbm [shape: f32[16,16,128], index: 2, kind: input, shape index: {}]
  %s3 = inlined_call_operand.hbm [shape: f32[16,16,128], index: 3, kind: output, shape index: {}]
  %s4 = sld [smem:[#allocation0]]
  $region57: #{tpu_custom_call.1} parent=0
    _
  %s6 = ssub.s32 1, %s4
  %s7 = scalar_select 0, %s6, %s4
  $region1: #{tpu_custom_call.1} parent=0
    #allocation2 [shape = 'u8[8192]{0}', space=vmem, size = 0x2000, scoped, tag = 'input window, operand 0']
    #allocation3 [shape = 's32[2]{0}', space=sflag, size = 0x8, scoped, tag = 'scoped memory for tpu_custom_call.1']
    #allocation4 [shape = 's32[2]{0}', space=sflag, size = 0x8, scoped, tag = 'scoped memory for tpu_custom_call.1']
    #allocation5 [shape = 'u8[8192]{0}', space=vmem, size = 0x2000, scoped, tag = 'input window, operand 1']
    #allocation6 [shape = 's32[2]{0}', space=sflag, size = 0x8, scoped, tag = 'scoped memory for tpu_custom_call.1']
    #allocation7 [shape = 'u8[131072]{0}', space=vmem, size = 0x20000, scoped, tag = 'input window, operand 2']
    #allocation8 [shape = 'u8[131072]{0}', space=vmem, size = 0x20000, scoped, tag = 'output window, operand 0']
    %8 = vsyncpa [#allocation3], 0
    %s9 = scalar_lea.sflag [#allocation3], 1
    %10 = vsyncpa %s9, 0
    %11 = vsyncpa [#allocation6], 0
    %s12 = scalar_lea.sflag [#allocation6], 1
    %13 = vsyncpa %s12, 0
    %14 = vsyncpa [#allocation4], 0
    %s15 = scalar_lea.sflag [#allocation4], 1
    %16 = vsyncpa %s15, 0
    loop: start=0, step=1, limit=4
    $region2: #{tpu_custom_call.1} parent=1 // loop_pre_header
      _
    $region3: #{tpu_custom_call.1} parent=1 // loop_header
      %s18 = sphi 0, %s22
      %p19 = scmp.ge.s32.totalorder %s18, 4
      %s25 = sphi 0, %s37
      %s26 = sphi 0, %s33
      %s27 = sphi 0, %s25
      %s28 = sphi 0, %s26
      %s29 = sphi 0, %s27
      %s30 = sphi 0, %s28
      %s40 = sphi 0, %s42
      %s43 = sphi 0, %s40
      %s44 = sphi 0, %s43
      %s60 = sphi 0, %s44
      %s66 = sphi 0, %s68
      %s69 = sphi 0, %s66
      %s70 = sphi 0, %s69
      %s86 = sphi 0, %s70
      %s94 = sphi 0, %s96
      %s97 = sphi 0, %s94
      %s98 = sphi 0, %s97
      %s114 = sphi 0, %s98
      %s122 = sphi 0, %s124
      %s125 = sphi 0, %s122
      %s126 = sphi 0, %s125
      %s142 = sphi 0, %s126
    $region4: #{tpu_custom_call.1} parent=1 // loop_header_branch
      %21 = sbr.rel (%p19) target = $region8
    $region5: #{tpu_custom_call.1} parent=1 // loop_body
      %s23 = ssub.s32 %s18, 1
      %s24 = ssub.s32 %s18, 2
      %s31 = sadd.s32 1, %s26
      %p32 = scmp.ge.s32.totalorder %s31, 1
      %s33 = scalar_select %p32, 0, %s31
      %s34 = sadd.s32 1, %s25
      %s35 = scalar_select %p32, %s34, %s25
      %p36 = scmp.ge.s32.totalorder %s35, 2
      %s37 = scalar_select %p36, 0, %s35
      %s38 = ssub.s32 %s25, %s37
      %p39 = scmp.eq.s32.totalorder %s38, 0
      %s41 = sadd.s32 %s40, 1
      %s42 = scalar_select %p39, %s40, %s41
      %p45 = pneg %p39
      %p46 = scmp.eq.s32.totalorder %s18, 1
      %p47 = por %p45, %p46
      %p48 = scmp.ne.s32.totalorder %s40, %s43
      %p49 = scmp.eq.s32.totalorder %s18, 0
      %p50 = por %p48, %p49
      %p51 = scmp.ne.s32.totalorder %s40, %s43
      %p52 = scmp.eq.s32.totalorder %s23, 1
      %p53 = por %p51, %p52
      %p54 = scmp.ne.s32.totalorder %s43, %s44
      %p55 = scmp.eq.s32.totalorder %s23, 0
      %p56 = por %p54, %p55
      %p57 = scmp.ne.s32.totalorder %s43, %s44
      %p58 = scmp.eq.s32.totalorder %s24, 1
      %p59 = por %p57, %p58
      %p61 = scmp.ne.s32.totalorder %s44, %s60
      %p62 = scmp.eq.s32.totalorder %s24, 0
      %p63 = por %p61, %p62
      %s64 = ssub.s32 %s25, %s37
      %p65 = scmp.eq.s32.totalorder %s64, 0
      %s67 = sadd.s32 %s66, 1
      %s68 = scalar_select %p65, %s66, %s67
      %p71 = pneg %p65
      %p72 = scmp.eq.s32.totalorder %s18, 1
      %p73 = por %p71, %p72
      %p74 = scmp.ne.s32.totalorder %s66, %s69
      %p75 = scmp.eq.s32.totalorder %s18, 0
      %p76 = por %p74, %p75
      %p77 = scmp.ne.s32.totalorder %s66, %s69
      %p78 = scmp.eq.s32.totalorder %s23, 1
      %p79 = por %p77, %p78
      %p80 = scmp.ne.s32.totalorder %s69, %s70
      %p81 = scmp.eq.s32.totalorder %s23, 0
      %p82 = por %p80, %p81
      %p83 = scmp.ne.s32.totalorder %s69, %s70
      %p84 = scmp.eq.s32.totalorder %s24, 1
      %p85 = por %p83, %p84
      %p87 = scmp.ne.s32.totalorder %s70, %s86
      %p88 = scmp.eq.s32.totalorder %s24, 0
      %p89 = por %p87, %p88
      %s90 = ssub.s32 %s25, %s37
      %s91 = ssub.s32 %s26, %s33
      %s92 = sor.u32 %s90, %s91
      %p93 = scmp.eq.s32.totalorder %s92, 0
      %s95 = sadd.s32 %s94, 1
      %s96 = scalar_select %p93, %s94, %s95
      %p99 = pneg %p93
      %p100 = scmp.eq.s32.totalorder %s18, 1
      %p101 = por %p99, %p100
      %p102 = scmp.ne.s32.totalorder %s94, %s97
      %p103 = scmp.eq.s32.totalorder %s18, 0
      %p104 = por %p102, %p103
      %p105 = scmp.ne.s32.totalorder %s94, %s97
      %p106 = scmp.eq.s32.totalorder %s23, 1
      %p107 = por %p105, %p106
      %p108 = scmp.ne.s32.totalorder %s97, %s98
      %p109 = scmp.eq.s32.totalorder %s23, 0
      %p110 = por %p108, %p109
      %p111 = scmp.ne.s32.totalorder %s97, %s98
      %p112 = scmp.eq.s32.totalorder %s24, 1
      %p113 = por %p111, %p112
      %p115 = scmp.ne.s32.totalorder %s98, %s114
      %p116 = scmp.eq.s32.totalorder %s24, 0
      %p117 = por %p115, %p116
      %s118 = ssub.s32 %s25, %s37
      %s119 = ssub.s32 %s26, %s33
      %s120 = sor.u32 %s118, %s119
      %p121 = scmp.eq.s32.totalorder %s120, 0
      %s123 = sadd.s32 %s122, 1
      %s124 = scalar_select %p121, %s122, %s123
      %p127 = pneg %p121
      %p128 = scmp.eq.s32.totalorder %s18, 1
      %p129 = por %p127, %p128
      %p130 = scmp.ne.s32.totalorder %s122, %s125
      %p131 = scmp.eq.s32.totalorder %s18, 0
      %p132 = por %p130, %p131
      %p133 = scmp.ne.s32.totalorder %s122, %s125
      %p134 = scmp.eq.s32.totalorder %s23, 1
      %p135 = por %p133, %p134
      %p136 = scmp.ne.s32.totalorder %s125, %s126
      %p137 = scmp.eq.s32.totalorder %s23, 0
      %p138 = por %p136, %p137
      %p139 = scmp.ne.s32.totalorder %s125, %s126
      %p140 = scmp.eq.s32.totalorder %s24, 1
      %p141 = por %p139, %p140
      %p143 = scmp.ne.s32.totalorder %s126, %s142
      %p144 = scmp.eq.s32.totalorder %s24, 0
      %p145 = por %p143, %p144
      %p146 = scmp.le.s32.totalorder 1, %s18
      %p147 = scmp.lt.s32.totalorder %s18, 3
      %p148 = pnand %p146, %p147
      %p149 = pneg %p148
      // Predicated region
      $region9: #{tpu_custom_call.1} parent=5 // pred_check
        _
      $region10: #{tpu_custom_call.1} parent=5 // pred_check_branch
        %151 = sbr.rel (%p148) target = $region12
      $region11: #{tpu_custom_call.1} parent=5 // pred_region
        %s152 = ssub.s32 %s18, 1
      $region12: #{tpu_custom_call.1} parent=5 // pred_fallthru
        _
      %p153 = scmp.lt.s32.totalorder %s18, 2
      // Predicated region
      $region13: #{tpu_custom_call.1} parent=5 // pred_check
        %p154 = pneg %p153
      $region14: #{tpu_custom_call.1} parent=5 // pred_check_branch
        %156 = sbr.rel (%p154) target = $region16
      $region15: #{tpu_custom_call.1} parent=5 // pred_region
        // Predicated region
        $region17: #{tpu_custom_call.1} parent=15 // pred_check
          %p157 = pneg %p50
        $region18: #{tpu_custom_call.1} parent=15 // pred_check_branch
          %159 = sbr.rel (%p157) target = $region20
        $region19: #{tpu_custom_call.1} parent=15 // pred_region
          %s160 = sand.u32 %s40, 1
          %s161 = scalar_lea.sflag [#allocation3], %s160
          %s162 = sand.u32 %s40, 1
          %s163 = smul.addr %s162, 8
          %s164 = scalar_lea.vmem [#allocation2], %s163
          %s165 = smul.u32 8, %s25
          %167 = vsyncadd %s161, 0
          %s168 = scalar_lea.hbm %s0, %s165
          %s169 = sshll.u32 %s168, 4
          %s170 = int_to_ptr.hbm [resolvable:$true] %s169
          %s171 = sshll.u32 %s164, 4
          %s172 = int_to_ptr.vmem [resolvable:$true] %s171
          %177 = dma.hbm_to_vmem [thread:$0]  %s170, 128, %s172, %s161, 16, 16, 1
        $region20: #{tpu_custom_call.1} parent=15 // pred_fallthru
          _
        // Predicated region
        $region21: #{tpu_custom_call.1} parent=15 // pred_check
          %p178 = pneg %p76
        $region22: #{tpu_custom_call.1} parent=15 // pred_check_branch
          %180 = sbr.rel (%p178) target = $region24
        $region23: #{tpu_custom_call.1} parent=15 // pred_region
          %s181 = sand.u32 %s18, 1
          %s182 = scalar_lea.sflag [#allocation6], %s181
          %s183 = sand.u32 %s66, 1
          %s184 = smul.addr %s183, 8
          %s185 = scalar_lea.vmem [#allocation5], %s184
          %s186 = smul.u32 8, %s25
          %188 = vsyncadd %s182, 0
          %s189 = scalar_lea.hbm %s1, %s186
          %s190 = sshll.u32 %s189, 4
          %s191 = int_to_ptr.hbm [resolvable:$true] %s190
          %s192 = sshll.u32 %s185, 4
          %s193 = int_to_ptr.vmem [resolvable:$true] %s192
          %198 = dma.hbm_to_vmem [thread:$0]  %s191, 128, %s193, %s182, 16, 16, 1
        $region24: #{tpu_custom_call.1} parent=15 // pred_fallthru
          _
        // Predicated region
        $region25: #{tpu_custom_call.1} parent=15 // pred_check
          %p199 = pneg %p104
        $region26: #{tpu_custom_call.1} parent=15 // pred_check_branch
          %201 = sbr.rel (%p199) target = $region28
        $region27: #{tpu_custom_call.1} parent=15 // pred_region
          %s202 = sand.u32 %s18, 1
          %s203 = scalar_lea.sflag [#allocation6], %s202
          %s204 = sand.u32 %s94, 1
          %s205 = smul.addr %s204, 128
          %s206 = scalar_lea.vmem [#allocation7], %s205
          %s207 = smul.u32 8, %s25
          %s208 = smul.u32 2, %s26
          %210 = vsyncadd %s203, 0
          %s211 = smul.addr %s207, 2
          %s212 = sadd.s32 %s208, %s211
          %s213 = smul.addr %s212, 8
          %s214 = scalar_lea.hbm %s2, %s213
          %s215 = sshll.u32 %s214, 4
          %s216 = int_to_ptr.hbm [resolvable:$true] %s215
          %s217 = sshll.u32 %s206, 4
          %s218 = int_to_ptr.vmem [resolvable:$true] %s217
          %223 = dma.hbm_to_vmem [thread:$0]  %s216, 2048, %s218, %s203, 128, 128, 8
        $region28: #{tpu_custom_call.1} parent=15 // pred_fallthru
          _
      $region16: #{tpu_custom_call.1} parent=5 // pred_fallthru
        _
      %p224 = scmp.le.s32.totalorder 1, %s18
      %p225 = scmp.lt.s32.totalorder %s18, 3
      %p226 = pnand %p224, %p225
      %p227 = pneg %p226
      // Predicated region
      $region29: #{tpu_custom_call.1} parent=5 // pred_check
        _
      $region30: #{tpu_custom_call.1} parent=5 // pred_check_branch
        %229 = sbr.rel (%p226) target = $region32
      $region31: #{tpu_custom_call.1} parent=5 // pred_region
        %s230 = ssub.s32 %s18, 1
        %s231 = sand.u32 %s43, 1
        %s232 = scalar_lea.sflag [#allocation3], %s231
        %s233 = sand.u32 %s43, 1
        %s234 = smul.addr %s233, 8
        %s235 = scalar_lea.vmem [#allocation2], %s234
        // Predicated region
        $region33: #{tpu_custom_call.1} parent=31 // pred_check
          %p236 = pneg %p56
        $region34: #{tpu_custom_call.1} parent=31 // pred_check_branch
          %238 = sbr.rel (%p236) target = $region36
        $region35: #{tpu_custom_call.1} parent=31 // pred_region
          %240 = dma.done %s232, 128
        $region36: #{tpu_custom_call.1} parent=31 // pred_fallthru
          _
        %s241 = sand.u32 %s23, 1
        %s242 = scalar_lea.sflag [#allocation6], %s241
        %s243 = sand.u32 %s69, 1
        %s244 = smul.addr %s243, 8
        %s245 = scalar_lea.vmem [#allocation5], %s244
        // Predicated region
        $region37: #{tpu_custom_call.1} parent=31 // pred_check
          %p246 = pneg %p82
        $region38: #{tpu_custom_call.1} parent=31 // pred_check_branch
          %248 = sbr.rel (%p246) target = $region40
        $region39: #{tpu_custom_call.1} parent=31 // pred_region
          %250 = dma.done %s242, 128
        $region40: #{tpu_custom_call.1} parent=31 // pred_fallthru
          _
        %s251 = sand.u32 %s23, 1
        %s252 = scalar_lea.sflag [#allocation6], %s251
        %s253 = sand.u32 %s97, 1
        %s254 = smul.addr %s253, 128
        %s255 = scalar_lea.vmem [#allocation7], %s254
        // Predicated region
        $region41: #{tpu_custom_call.1} parent=31 // pred_check
          %p256 = pneg %p110
        $region42: #{tpu_custom_call.1} parent=31 // pred_check_branch
          %258 = sbr.rel (%p256) target = $region44
        $region43: #{tpu_custom_call.1} parent=31 // pred_region
          %260 = dma.done %s252, 2048
        $region44: #{tpu_custom_call.1} parent=31 // pred_fallthru
          _
        %s261 = sand.u32 %s43, 1
        %s262 = scalar_lea.sflag [#allocation3], %s261
        %s263 = sand.u32 %s43, 1
        %s264 = smul.addr %s263, 8
        %s265 = scalar_lea.vmem [#allocation2], %s264
        %p266 = pneg %p56
        %p267 = pneg %p53
        %s268 = sand.u32 %s23, 1
        %s269 = scalar_lea.sflag [#allocation6], %s268
        %s270 = sand.u32 %s69, 1
        %s271 = smul.addr %s270, 8
        %s272 = scalar_lea.vmem [#allocation5], %s271
        %p273 = pneg %p82
        %p274 = pneg %p79
        %s275 = sand.u32 %s23, 1
        %s276 = scalar_lea.sflag [#allocation6], %s275
        %s277 = sand.u32 %s97, 1
        %s278 = smul.addr %s277, 128
        %s279 = scalar_lea.vmem [#allocation7], %s278
        %p280 = pneg %p110
        %p281 = pneg %p107
        %p282 = pneg %p138
        %p283 = pneg %p135
        %s284 = sand.u32 %s125, 1
        %s285 = scalar_lea.sflag [#allocation4], %s284
        %s286 = sand.u32 %s125, 1
        %s287 = smul.addr %s286, 128
        %s288 = scalar_lea.vmem [#allocation8], %s287
        %s289 = smul.u32 8, %s27
        %s290 = smul.u32 8, %s27
        %s291 = smul.u32 8, %s27
        %s292 = smul.u32 2, %s28
        %s293 = smul.u32 8, %s27
        %s294 = smul.u32 2, %s28
        %v295 = vld [vmem:[%s255] sm:$0xff]
        %v296 = vld [vmem:[%s255 + $0x8] sm:$0xff]
        %v297 = vld [vmem:[%s255 + $0x10] sm:$0xff]
        %v298 = vld [vmem:[%s255 + $0x18] sm:$0xff]
        %v299 = vld [vmem:[%s255 + $0x20] sm:$0xff]
        %v300 = vld [vmem:[%s255 + $0x28] sm:$0xff]
        %v301 = vld [vmem:[%s255 + $0x30] sm:$0xff]
        %v302 = vld [vmem:[%s255 + $0x38] sm:$0xff]
        %v303 = vld [vmem:[%s255 + $0x40] sm:$0xff]
        %v304 = vld [vmem:[%s255 + $0x48] sm:$0xff]
        %v305 = vld [vmem:[%s255 + $0x50] sm:$0xff]
        %v306 = vld [vmem:[%s255 + $0x58] sm:$0xff]
        %v307 = vld [vmem:[%s255 + $0x60] sm:$0xff]
        %v308 = vld [vmem:[%s255 + $0x68] sm:$0xff]
        %v309 = vld [vmem:[%s255 + $0x70] sm:$0xff]
        %v310 = vld [vmem:[%s255 + $0x78] sm:$0xff]
        %311 = vrot.lane.b32.xlu0 %v295, 64
        %v312 = vpop.permute.xlu0 %311
        %313 = vrot.lane.b32.xlu0 %v296, 64
        %v314 = vpop.permute.xlu0 %313
        %315 = vrot.lane.b32.xlu0 %v297, 64
        %v316 = vpop.permute.xlu0 %315
        %317 = vrot.lane.b32.xlu0 %v298, 64
        %v318 = vpop.permute.xlu0 %317
        %319 = vrot.lane.b32.xlu0 %v299, 64
        %v320 = vpop.permute.xlu0 %319
        %321 = vrot.lane.b32.xlu0 %v300, 64
        %v322 = vpop.permute.xlu0 %321
        %323 = vrot.lane.b32.xlu0 %v301, 64
        %v324 = vpop.permute.xlu0 %323
        %325 = vrot.lane.b32.xlu0 %v302, 64
        %v326 = vpop.permute.xlu0 %325
        %327 = vrot.lane.b32.xlu0 %v303, 64
        %v328 = vpop.permute.xlu0 %327
        %329 = vrot.lane.b32.xlu0 %v304, 64
        %v330 = vpop.permute.xlu0 %329
        %331 = vrot.lane.b32.xlu0 %v305, 64
        %v332 = vpop.permute.xlu0 %331
        %333 = vrot.lane.b32.xlu0 %v306, 64
        %v334 = vpop.permute.xlu0 %333
        %335 = vrot.lane.b32.xlu0 %v307, 64
        %v336 = vpop.permute.xlu0 %335
        %337 = vrot.lane.b32.xlu0 %v308, 64
        %v338 = vpop.permute.xlu0 %337
        %339 = vrot.lane.b32.xlu0 %v309, 64
        %v340 = vpop.permute.xlu0 %339
        %341 = vrot.lane.b32.xlu0 %v310, 64
        %v342 = vpop.permute.xlu0 %341
        %v343 = vld [vmem:[%s235] sm:$0x1]
        %v344 = vld [vmem:[%s235 + $0x1] sm:$0x1]
        %v345 = vld [vmem:[%s235 + $0x2] sm:$0x1]
        %v346 = vld [vmem:[%s235 + $0x3] sm:$0x1]
        %v347 = vld [vmem:[%s235 + $0x4] sm:$0x1]
        %v348 = vld [vmem:[%s235 + $0x5] sm:$0x1]
        %v349 = vld [vmem:[%s235 + $0x6] sm:$0x1]
        %v350 = vld [vmem:[%s235 + $0x7] sm:$0x1]
        %v359 = vperm.slane %v343, 0
        %v360 = vperm.slane %v344, 0
        %v361 = vperm.slane %v345, 0
        %v362 = vperm.slane %v346, 0
        %v363 = vperm.slane %v347, 0
        %v364 = vperm.slane %v348, 0
        %v365 = vperm.slane %v349, 0
        %v366 = vperm.slane %v350, 0
        %v375 = vmul.f32 %v295, %v359
        %v376 = vmul.f32 %v296, %v359
        %v377 = vmul.f32 %v297, %v360
        %v378 = vmul.f32 %v298, %v360
        %v379 = vmul.f32 %v299, %v361
        %v380 = vmul.f32 %v300, %v361
        %v381 = vmul.f32 %v301, %v362
        %v382 = vmul.f32 %v302, %v362
        %v383 = vmul.f32 %v303, %v363
        %v384 = vmul.f32 %v304, %v363
        %v385 = vmul.f32 %v305, %v364
        %v386 = vmul.f32 %v306, %v364
        %v387 = vmul.f32 %v307, %v365
        %v388 = vmul.f32 %v308, %v365
        %v389 = vmul.f32 %v309, %v366
        %v390 = vmul.f32 %v310, %v366
        %v391 = vld [vmem:[%s245] sm:$0x1]
        %v392 = vld [vmem:[%s245 + $0x1] sm:$0x1]
        %v393 = vld [vmem:[%s245 + $0x2] sm:$0x1]
        %v394 = vld [vmem:[%s245 + $0x3] sm:$0x1]
        %v395 = vld [vmem:[%s245 + $0x4] sm:$0x1]
        %v396 = vld [vmem:[%s245 + $0x5] sm:$0x1]
        %v397 = vld [vmem:[%s245 + $0x6] sm:$0x1]
        %v398 = vld [vmem:[%s245 + $0x7] sm:$0x1]
        %v407 = vperm.slane %v391, 0
        %v408 = vperm.slane %v392, 0
        %v409 = vperm.slane %v393, 0
        %v410 = vperm.slane %v394, 0
        %v411 = vperm.slane %v395, 0
        %v412 = vperm.slane %v396, 0
        %v413 = vperm.slane %v397, 0
        %v414 = vperm.slane %v398, 0
        %v423 = vmul.f32 %v312, %v407
        %v424 = vmul.f32 %v314, %v407
        %v425 = vmul.f32 %v316, %v408
        %v426 = vmul.f32 %v318, %v408
        %v427 = vmul.f32 %v320, %v409
        %v428 = vmul.f32 %v322, %v409
        %v429 = vmul.f32 %v324, %v410
        %v430 = vmul.f32 %v326, %v410
        %v431 = vmul.f32 %v328, %v411
        %v432 = vmul.f32 %v330, %v411
        %v433 = vmul.f32 %v332, %v412
        %v434 = vmul.f32 %v334, %v412
        %v435 = vmul.f32 %v336, %v413
        %v436 = vmul.f32 %v338, %v413
        %v437 = vmul.f32 %v340, %v414
        %v438 = vmul.f32 %v342, %v414
        %v439 = vadd.f32 %v375, %v423
        %v440 = vadd.f32 %v376, %v424
        %v441 = vadd.f32 %v377, %v425
        %v442 = vadd.f32 %v378, %v426
        %v443 = vadd.f32 %v379, %v427
        %v444 = vadd.f32 %v380, %v428
        %v445 = vadd.f32 %v381, %v429
        %v446 = vadd.f32 %v382, %v430
        %v447 = vadd.f32 %v383, %v431
        %v448 = vadd.f32 %v384, %v432
        %v449 = vadd.f32 %v385, %v433
        %v450 = vadd.f32 %v386, %v434
        %v451 = vadd.f32 %v387, %v435
        %v452 = vadd.f32 %v388, %v436
        %v453 = vadd.f32 %v389, %v437
        %v454 = vadd.f32 %v390, %v438
        %455 = vst [vmem:[%s288] sm:$0xff] %v439
        %456 = vst [vmem:[%s288 + $0x8] sm:$0xff] %v440
        %457 = vst [vmem:[%s288 + $0x10] sm:$0xff] %v441
        %458 = vst [vmem:[%s288 + $0x18] sm:$0xff] %v442
        %459 = vst [vmem:[%s288 + $0x20] sm:$0xff] %v443
        %460 = vst [vmem:[%s288 + $0x28] sm:$0xff] %v444
        %461 = vst [vmem:[%s288 + $0x30] sm:$0xff] %v445
        %462 = vst [vmem:[%s288 + $0x38] sm:$0xff] %v446
        %463 = vst [vmem:[%s288 + $0x40] sm:$0xff] %v447
        %464 = vst [vmem:[%s288 + $0x48] sm:$0xff] %v448
        %465 = vst [vmem:[%s288 + $0x50] sm:$0xff] %v449
        %466 = vst [vmem:[%s288 + $0x58] sm:$0xff] %v450
        %467 = vst [vmem:[%s288 + $0x60] sm:$0xff] %v451
        %468 = vst [vmem:[%s288 + $0x68] sm:$0xff] %v452
        %469 = vst [vmem:[%s288 + $0x70] sm:$0xff] %v453
        %470 = vst [vmem:[%s288 + $0x78] sm:$0xff] %v454
        %s471 = sand.u32 %s125, 1
        %s472 = scalar_lea.sflag [#allocation4], %s471
        %s473 = sand.u32 %s125, 1
        %s474 = smul.addr %s473, 128
        %s475 = scalar_lea.vmem [#allocation8], %s474
        // Predicated region
        $region45: #{tpu_custom_call.1} parent=31 // pred_check
          %p476 = pneg %p135
        $region46: #{tpu_custom_call.1} parent=31 // pred_check_branch
          %478 = sbr.rel (%p476) target = $region48
        $region47: #{tpu_custom_call.1} parent=31 // pred_region
          %s479 = smul.u32 8, %s27
          %s480 = smul.u32 2, %s28
          %482 = vsyncadd %s472, 0
          %s483 = smul.addr %s479, 2
          %s484 = sadd.s32 %s480, %s483
          %s485 = smul.addr %s484, 8
          %s486 = scalar_lea.hbm %s3, %s485
          %s487 = sshll.u32 %s475, 4
          %s488 = int_to_ptr.vmem [resolvable:$true] %s487
          %s489 = sshll.u32 %s486, 4
          %s490 = int_to_ptr.hbm [resolvable:$true] %s489
          %495 = dma.vmem_to_hbm [thread:$0]  %s488, 2048, %s490, %s472, 128, 128, 8
        $region48: #{tpu_custom_call.1} parent=31 // pred_fallthru
          _
      $region32: #{tpu_custom_call.1} parent=5 // pred_fallthru
        _
      %p496 = scmp.le.s32.totalorder 2, %s18
      // Predicated region
      $region49: #{tpu_custom_call.1} parent=5 // pred_check
        %p497 = pneg %p496
      $region50: #{tpu_custom_call.1} parent=5 // pred_check_branch
        %499 = sbr.rel (%p497) target = $region52
      $region51: #{tpu_custom_call.1} parent=5 // pred_region
        %s500 = ssub.s32 %s18, 2
        // Predicated region
        $region53: #{tpu_custom_call.1} parent=51 // pred_check
          %p501 = pneg %p141
        $region54: #{tpu_custom_call.1} parent=51 // pred_check_branch
          %503 = sbr.rel (%p501) target = $region56
        $region55: #{tpu_custom_call.1} parent=51 // pred_region
          %s504 = sand.u32 %s126, 1
          %s505 = scalar_lea.sflag [#allocation4], %s504
          %s506 = sand.u32 %s126, 1
          %s507 = smul.addr %s506, 128
          %s508 = scalar_lea.vmem [#allocation8], %s507
          %510 = dma.done %s505, 2048
        $region56: #{tpu_custom_call.1} parent=51 // pred_fallthru
          _
      $region52: #{tpu_custom_call.1} parent=5 // pred_fallthru
        _
    $region6: #{tpu_custom_call.1} parent=1 // loop_footer
      %s22 = sadd.s32 1, %s18
    $region7: #{tpu_custom_call.1} parent=1 // loop_footer_branch
      %17 = sbr.rel target = $region3
    $region8: #{tpu_custom_call.1} parent=1 // loop_exit
      _
    %511 = vsyncpa [#allocation3], 1
    %s512 = scalar_lea.sflag [#allocation3], 1
    %513 = vsyncpa %s512, 1
    %514 = vsyncpa [#allocation6], 1
    %s515 = scalar_lea.sflag [#allocation6], 1
    %516 = vsyncpa %s515, 1
    %517 = vsyncpa [#allocation4], 1
    %s518 = scalar_lea.sflag [#allocation4], 1
    %519 = vsyncpa %s518, 1

</llo_original>
